<compile_context>
chip_gen: v7x
topology: tpu7x:2x2x1
jax: 0.10.0
libtpu: 0.0.40
codegen_flags: <defaults>
</compile_context>

<pallas_src>
import math

import jax
import jax.numpy as jnp
import numpy as np
from jax.experimental import pallas as pl
from jax.experimental.pallas import tpu as pltpu

# Gaussian channel layout along the C=14 axis:
#   features(3) | uv_offset(2) | depth(1) | opacity(1) | scales(3) | rotations(4)
GAUSSIAN_CHANNELS = [3, 2, 1, 1, 3, 4]
NUM_C = sum(GAUSSIAN_CHANNELS)  # 14

# muls buffer from __init__, normalized by its max (0.05)
_RAW_MULS = [0.01] * 3 + [0.01] * 2 + [0.05] + [0.05] + [0.005] * 3 + [0.005] * 4
_MULS = [m / max(_RAW_MULS) for m in _RAW_MULS]  # [0.2]*5 + [1.0]*2 + [0.1]*7

MUL_FEAT = _MULS[0]     # 0.2
MUL_UV = _MULS[3]       # 0.2
MUL_DEPTH = _MULS[5]    # 1.0  (identity; folded out)
MUL_OPAC = _MULS[6]     # 1.0  (identity; folded out)
MUL_SCALE = _MULS[7]    # 0.1
MUL_ROT = _MULS[10]     # 0.1

OPACITY_OFFSET = math.log(0.01 / 0.99)  # inverse_sigmoid(0.01)
SCALES_OFFSET = math.log(1.0 / 100.0)
SH_C0 = 0.28209479177387814
EPS = 1e-12  # F.normalize eps


def _converter_kernel(cam_ref, pix_ref, params_ref,
                      xyz_ref, feat_ref, opac_ref, scl_ref, rot_ref):
    # cam_ref    : (BN*16,) SMEM  [R row-major(9), t(3), 1/cx, 1/cy, cx/fx, cy/fy]
    # pix_ref    : (2, TPG, 128)  pixel coords (i+0.5, j+0.5), f32
    # params_ref : (1, 14, TPG, 128) gaussian params for (camera, point tile)
    # outputs (channel-major, dense 8x128 planes):
    #   xyz (1,3,TPG,128) | feat (1,3,..) | opac (1,1,..) | scales (1,3,..) | rot (1,4,..)
    b = pl.program_id(1)
    base = b * 16
    r00 = cam_ref[base + 0]; r01 = cam_ref[base + 1]; r02 = cam_ref[base + 2]
    r10 = cam_ref[base + 3]; r11 = cam_ref[base + 4]; r12 = cam_ref[base + 5]
    r20 = cam_ref[base + 6]; r21 = cam_ref[base + 7]; r22 = cam_ref[base + 8]
    t0 = cam_ref[base + 9]; t1 = cam_ref[base + 10]; t2 = cam_ref[base + 11]
    inv_cx = cam_ref[base + 12]; inv_cy = cam_ref[base + 13]
    cx_fx = cam_ref[base + 14]; cy_fy = cam_ref[base + 15]

    f32 = jnp.float32

    # ---- rays / xyz ----
    u = pix_ref[0] * inv_cx + params_ref[0, 3].astype(f32) * MUL_UV
    v = pix_ref[1] * inv_cy + params_ref[0, 4].astype(f32) * MUL_UV
    xs = (u - 1.0) * cx_fx           # = -(u-1)*cx/fx*zs with zs = -1
    ys = (1.0 - v) * cy_fy           # =  (v-1)*cy/fy*zs
    dx = xs * r00 + ys * r01 - r02   # directions @ R^T rows, zs=-1 folded in
    dy = xs * r10 + ys * r11 - r12
    dz = xs * r20 + ys * r21 - r22
    # F.normalize: x / max(||x||, eps)  ==  x * rsqrt(max(||x||^2, eps^2))
    inv_n = jax.lax.rsqrt(jnp.maximum(dx * dx + dy * dy + dz * dz, EPS * EPS))
    depth = params_ref[0, 5].astype(f32) + 1.85          # MUL_DEPTH == 1.0
    s = depth * inv_n
    xyz_ref[0] = jnp.stack([t0 + s * dx, t1 + s * dy, t2 + s * dz], axis=0)

    # ---- features / opacity / scales (grouped multi-channel stores) ----
    feat_ref[0] = params_ref[0, 0:3].astype(f32) * (MUL_FEAT / (2.0 * SH_C0))
    opac_ref[0] = jax.nn.sigmoid(params_ref[0, 6:7].astype(f32) + OPACITY_OFFSET)  # MUL_OPAC == 1.0
    scl_ref[0] = jnp.exp(params_ref[0, 7:10].astype(f32) * MUL_SCALE + SCALES_OFFSET)

    # ---- rotations (offset [1,0,0,0], then normalize) ----
    q0 = params_ref[0, 10].astype(f32) * MUL_ROT + 1.0
    q1 = params_ref[0, 11].astype(f32) * MUL_ROT
    q2 = params_ref[0, 12].astype(f32) * MUL_ROT
    q3 = params_ref[0, 13].astype(f32) * MUL_ROT
    inv_q = jax.lax.rsqrt(
        jnp.maximum(q0 * q0 + q1 * q1 + q2 * q2 + q3 * q3, EPS * EPS))
    rot_ref[0] = jnp.stack([q0, q1, q2, q3], axis=0) * inv_q


def _choose_point_tiling(P, max_tpg=128):
    """Return (P_pad, TPG): P_pad % 128 == 0 and TPG divides PG = P_pad // 128.

    TPG is either the full point-group extent (small images) or a multiple of 8
    capped at `max_tpg` (16384 points) -> blocks are always (8,128)-legal and
    VMEM stays bounded (~4 MiB double-buffered at the cap); there is no untiled
    full-P fallback.
    """
    pg = -(-P // 128)
    if pg <= max_tpg:
        return pg * 128, pg
    pg = -(-pg // 8) * 8          # pad so a multiple-of-8 tile always exists
    tpg = 8
    for cand in range(8, max_tpg + 1, 8):
        if pg % cand == 0:
            tpg = cand
    return pg * 128, tpg


def gaussian_converter(local_gaussian_params, cameras):
    B, N, C, h, w = local_gaussian_params.shape
    assert C == NUM_C
    P = h * w
    BN = B * N
    M = N * P

    P_pad, TPG = _choose_point_tiling(P)
    PG = P_pad // 128
    n_pt = PG // TPG

    # params stay in their HBM dtype (e.g. bf16); cast happens in-kernel.
    params = local_gaussian_params.reshape(BN, C, P)
    if P_pad != P:
        params = jnp.pad(params, ((0, 0), (0, 0), (0, P_pad - P)))
    params = params.reshape(BN, C, PG, 128)

    # ---- derived per-camera scalars (tiny; done once in plain JAX) ----
    cams = cameras.reshape(BN, 18).astype(jnp.float32)
    fx = cams[:, 12] * float(h) / cams[:, 16]
    fy = cams[:, 13] * float(w) / cams[:, 17]
    cx = cams[:, 14] * float(h) / cams[:, 16]
    cy = cams[:, 15] * float(w) / cams[:, 17]
    c2w = cams[:, :12].reshape(BN, 3, 4)
    R = c2w[:, :, :3].reshape(BN, 9)
    t = c2w[:, :, 3]
    cam_tab = jnp.concatenate(
        [R, t,
         (1.0 / cx)[:, None], (1.0 / cy)[:, None],
         (cx / fx)[:, None], (cy / fy)[:, None]], axis=-1).reshape(-1)  # (BN*16,)

    # ---- pixel grid (computed once; folded to (2, PG, 128)) ----
    idx = jnp.arange(P_pad, dtype=jnp.int32)
    pix = jnp.stack([(idx % w).astype(jnp.float32) + 0.5,
                     (idx // w).astype(jnp.float32) + 0.5], axis=0)
    pix = pix.reshape(2, PG, 128)

    out_dt = jnp.float32
    out_shapes = (
        jax.ShapeDtypeStruct((BN, 3, PG, 128), out_dt),   # xyz
        jax.ShapeDtypeStruct((BN, 3, PG, 128), out_dt),   # features
        jax.ShapeDtypeStruct((BN, 1, PG, 128), out_dt),   # opacity
        jax.ShapeDtypeStruct((BN, 3, PG, 128), out_dt),   # scales
        jax.ShapeDtypeStruct((BN, 4, PG, 128), out_dt),   # rotations
    )

    def out_spec(ci):
        return pl.BlockSpec((1, ci, TPG, 128), lambda p, b: (b, 0, p, 0))

    xyz_c, feat_c, opac_c, scl_c, rot_c = pl.pallas_call(
        _converter_kernel,
        # BN innermost: the pixel-grid block index is unchanged between
        # consecutive grid steps, so Pallas keeps it resident (no re-DMA).
        grid=(n_pt, BN),
        in_specs=[
            pl.BlockSpec(memory_space=pltpu.MemorySpace.SMEM),          # camera table
            pl.BlockSpec((2, TPG, 128), lambda p, b: (0, p, 0)),        # pixel grid
            pl.BlockSpec((1, C, TPG, 128), lambda p, b: (b, 0, p, 0)),  # gaussian params
        ],
        out_specs=[out_spec(3), out_spec(3), out_spec(1), out_spec(3), out_spec(4)],
        out_shape=out_shapes,
        compiler_params=pltpu.CompilerParams(
            dimension_semantics=("parallel", "parallel")),
    )(cam_tab, pix, params)

    def to_point_major(x_c, ci):
        # (BN, ci, PG, 128) -> (B, M, ci).
        # This channel->point transpose is the only epilogue left: the module's
        # output contract has a tiny (1/3/4-wide) minor dim, so it must be paid
        # somewhere; doing it in-kernel would lane-pad every output vreg and
        # make the kernel store-slot bound, so it is left to a single XLA pass.
        x = jnp.transpose(x_c, (0, 2, 3, 1)).reshape(BN, P_pad, ci)
        if P_pad != P:
            x = x[:, :P, :]
        return x.reshape(B, M, ci)

    xyz = to_point_major(xyz_c, 3)
    features = to_point_major(feat_c, 3).reshape(B, M, 1, 3)
    opacity = to_point_major(opac_c, 1)   # ci == 1: transpose is layout-free
    scales = to_point_major(scl_c, 3)
    rotations = to_point_major(rot_c, 4)
    return xyz, features, opacity, scales, rotations


def gaussian_converter_ref(local_gaussian_params, cameras):
    """Pure-JAX reference mirroring the PyTorch forward, for validation."""
    B, N, C, h, w = local_gaussian_params.shape
    muls = jnp.array(_MULS, jnp.float32)
    x = jnp.transpose(local_gaussian_params.astype(jnp.float32),
                      (0, 1, 3, 4, 2)).reshape(-1, C) * muls
    features = x[:, 0:3]
    uv_offset = x[:, 3:5]
    depth = x[:, 5:6]
    opacity = x[:, 6:7]
    scales = x[:, 7:10]
    rotations = x[:, 10:14]

    cams = cameras.reshape(-1, 18).astype(jnp.float32)
    BN = cams.shape[0]
    c2w = jnp.broadcast_to(jnp.eye(4, dtype=jnp.float32), (BN, 4, 4))
    c2w = c2w.at[:, :3, :].set(cams[:, :12].reshape(BN, 3, 4))
    fx, fy, cx, cy, H, W = jnp.split(cams[:, 12:], 6, axis=-1)
    fx, cx = fx * h / H, cx * h / H
    fy, cy = fy * w / W, cy * w / W

    inds = jnp.broadcast_to(jnp.arange(h * w), (BN, h * w))
    i = inds % w + 0.5
    j = inds // w + 0.5
    u = i / cx + uv_offset[..., 0].reshape(BN, h * w)
    v = j / cy + uv_offset[..., 1].reshape(BN, h * w)
    zs = -jnp.ones_like(u)
    xs = -(u - 1) * cx / fx * zs
    ys = (v - 1) * cy / fy * zs
    directions = jnp.stack((xs, ys, zs), axis=-1)
    rays_d = jnp.einsum('bpc,bkc->bpk', directions, c2w[:, :3, :3])
    rays_d = rays_d / jnp.maximum(
        jnp.linalg.norm(rays_d, axis=-1, keepdims=True), EPS)
    rays_o = jnp.broadcast_to(c2w[:, None, :3, 3], rays_d.shape).reshape(-1, 3)
    rays_d = rays_d.reshape(-1, 3)
    depth = depth.reshape(-1, 1) + 1.85
    xyz = rays_o + depth * rays_d
    features = features.reshape(-1, 1, 3) / (2 * SH_C0)
    opacity = jax.nn.sigmoid(opacity + OPACITY_OFFSET)
    scales = jnp.exp(scales + SCALES_OFFSET)
    rot = rotations + jnp.array([1.0, 0.0, 0.0, 0.0], jnp.float32)
    rot = rot / jnp.maximum(jnp.linalg.norm(rot, axis=-1, keepdims=True), EPS)
    return (xyz.reshape(B, -1, 3), features.reshape(B, -1, 1, 3),
            opacity.reshape(B, -1, 1), scales.reshape(B, -1, 3),
            rot.reshape(B, -1, 4))


def _make_cameras(B, N, h, w):
    BN = B * N
    rows = []
    for idx in range(BN):
        a = 0.1 * idx
        R = np.array([[np.cos(a), -np.sin(a), 0.0],
                      [np.sin(a), np.cos(a), 0.0],
                      [0.0, 0.0, 1.0]], np.float32)
        t = np.array([0.1 * idx, -0.2 * idx, 1.0 + 0.05 * idx], np.float32)
        c2w34 = np.concatenate([R, t[:, None]], axis=1).reshape(-1)  # (12,)
        # fx, fy, cx, cy, H, W
        intr = np.array([60.0, 58.0, 0.5 * 4 * h, 0.45 * 4 * w,
                         float(4 * h), float(4 * w)], np.float32)
        rows.append(np.concatenate([c2w34, intr]).astype(np.float32))
    return jnp.asarray(np.stack(rows).reshape(B, N, 18), jnp.float32)


def _check(B, N, h, w, seed):
    key = jax.random.PRNGKey(seed)
    params = jax.random.normal(key, (B, N, NUM_C, h, w), jnp.float32)
    cams = _make_cameras(B, N, h, w)
    outs = jax.block_until_ready(gaussian_converter(params, cams))
    refs = jax.block_until_ready(gaussian_converter_ref(params, cams))
    for o, r in zip(outs, refs):
        np.testing.assert_allclose(np.asarray(o), np.asarray(r),
                                   rtol=2e-3, atol=2e-5)


if __name__ == "__main__":
    # Primary small test (P multiple of 128, no padding path).
    _check(B=2, N=2, h=16, w=16, seed=0)
    # Padding path (P = 160 -> padded to 256).
    _check(B=2, N=1, h=8, w=20, seed=0)
    print("KERNEL_OK")
</pallas_src>

<mosaic_0001>
module attributes {stable_mosaic.version = 11 : i64} {
  func.func @_converter_kernel(%arg0: i32, %arg1: i32, %arg2: memref<64xf32, #tpu.memory_space<smem>>, %arg3: memref<2x2x128xf32, #tpu.memory_space<vmem>>, %arg4: memref<1x14x2x128xf32, #tpu.memory_space<vmem>>, %arg5: memref<1x3x2x128xf32, #tpu.memory_space<vmem>>, %arg6: memref<1x3x2x128xf32, #tpu.memory_space<vmem>>, %arg7: memref<1x1x2x128xf32, #tpu.memory_space<vmem>>, %arg8: memref<1x3x2x128xf32, #tpu.memory_space<vmem>>, %arg9: memref<1x4x2x128xf32, #tpu.memory_space<vmem>>) attributes {dimension_semantics = [#tpu.dimension_semantics<parallel>, #tpu.dimension_semantics<parallel>], iteration_bounds = array<i64: 1, 4>, scalar_prefetch = 0 : i64, scratch_operands = 0 : i64, tpu.core_type = #tpu.core_type<tc>, window_params = [{transform_indices = @transform_0, window_bounds = array<i64: 64>}, {transform_indices = @transform_1, window_bounds = array<i64: 2, 2, 128>}, {transform_indices = @transform_2, window_bounds = array<i64: 1, 14, 2, 128>}, {transform_indices = @transform_3, window_bounds = array<i64: 1, 3, 2, 128>}, {transform_indices = @transform_4, window_bounds = array<i64: 1, 3, 2, 128>}, {transform_indices = @transform_5, window_bounds = array<i64: 1, 1, 2, 128>}, {transform_indices = @transform_6, window_bounds = array<i64: 1, 3, 2, 128>}, {transform_indices = @transform_7, window_bounds = array<i64: 1, 4, 2, 128>}]} {
    %c16_i32 = arith.constant 16 : i32
    %0 = arith.muli %arg1, %c16_i32 : i32
    %c0_i32 = arith.constant 0 : i32
    %1 = arith.addi %0, %c0_i32 : i32
    %2 = arith.index_cast %1 : i32 to index
    %3 = memref.load %arg2[%2] : memref<64xf32, #tpu.memory_space<smem>>
    %c1_i32 = arith.constant 1 : i32
    %4 = arith.addi %0, %c1_i32 : i32
    %5 = arith.index_cast %4 : i32 to index
    %6 = memref.load %arg2[%5] : memref<64xf32, #tpu.memory_space<smem>>
    %c2_i32 = arith.constant 2 : i32
    %7 = arith.addi %0, %c2_i32 : i32
    %8 = arith.index_cast %7 : i32 to index
    %9 = memref.load %arg2[%8] : memref<64xf32, #tpu.memory_space<smem>>
    %c3_i32 = arith.constant 3 : i32
    %10 = arith.addi %0, %c3_i32 : i32
    %11 = arith.index_cast %10 : i32 to index
    %12 = memref.load %arg2[%11] : memref<64xf32, #tpu.memory_space<smem>>
    %c4_i32 = arith.constant 4 : i32
    %13 = arith.addi %0, %c4_i32 : i32
    %14 = arith.index_cast %13 : i32 to index
    %15 = memref.load %arg2[%14] : memref<64xf32, #tpu.memory_space<smem>>
    %c5_i32 = arith.constant 5 : i32
    %16 = arith.addi %0, %c5_i32 : i32
    %17 = arith.index_cast %16 : i32 to index
    %18 = memref.load %arg2[%17] : memref<64xf32, #tpu.memory_space<smem>>
    %c6_i32 = arith.constant 6 : i32
    %19 = arith.addi %0, %c6_i32 : i32
    %20 = arith.index_cast %19 : i32 to index
    %21 = memref.load %arg2[%20] : memref<64xf32, #tpu.memory_space<smem>>
    %c7_i32 = arith.constant 7 : i32
    %22 = arith.addi %0, %c7_i32 : i32
    %23 = arith.index_cast %22 : i32 to index
    %24 = memref.load %arg2[%23] : memref<64xf32, #tpu.memory_space<smem>>
    %c8_i32 = arith.constant 8 : i32
    %25 = arith.addi %0, %c8_i32 : i32
    %26 = arith.index_cast %25 : i32 to index
    %27 = memref.load %arg2[%26] : memref<64xf32, #tpu.memory_space<smem>>
    %c9_i32 = arith.constant 9 : i32
    %28 = arith.addi %0, %c9_i32 : i32
    %29 = arith.index_cast %28 : i32 to index
    %30 = memref.load %arg2[%29] : memref<64xf32, #tpu.memory_space<smem>>
    %c10_i32 = arith.constant 10 : i32
    %31 = arith.addi %0, %c10_i32 : i32
    %32 = arith.index_cast %31 : i32 to index
    %33 = memref.load %arg2[%32] : memref<64xf32, #tpu.memory_space<smem>>
    %c11_i32 = arith.constant 11 : i32
    %34 = arith.addi %0, %c11_i32 : i32
    %35 = arith.index_cast %34 : i32 to index
    %36 = memref.load %arg2[%35] : memref<64xf32, #tpu.memory_space<smem>>
    %c12_i32 = arith.constant 12 : i32
    %37 = arith.addi %0, %c12_i32 : i32
    %38 = arith.index_cast %37 : i32 to index
    %39 = memref.load %arg2[%38] : memref<64xf32, #tpu.memory_space<smem>>
    %c13_i32 = arith.constant 13 : i32
    %40 = arith.addi %0, %c13_i32 : i32
    %41 = arith.index_cast %40 : i32 to index
    %42 = memref.load %arg2[%41] : memref<64xf32, #tpu.memory_space<smem>>
    %c14_i32 = arith.constant 14 : i32
    %43 = arith.addi %0, %c14_i32 : i32
    %44 = arith.index_cast %43 : i32 to index
    %45 = memref.load %arg2[%44] : memref<64xf32, #tpu.memory_space<smem>>
    %c15_i32 = arith.constant 15 : i32
    %46 = arith.addi %0, %c15_i32 : i32
    %47 = arith.index_cast %46 : i32 to index
    %48 = memref.load %arg2[%47] : memref<64xf32, #tpu.memory_space<smem>>
    %c0 = arith.constant 0 : index
    %c0_0 = arith.constant 0 : index
    %c0_1 = arith.constant 0 : index
    %49 = vector.load %arg3[%c0, %c0_0, %c0_1] : memref<2x2x128xf32, #tpu.memory_space<vmem>>, vector<1x2x128xf32>
    %50 = vector.shape_cast %49 : vector<1x2x128xf32> to vector<2x128xf32>
    %51 = vector.broadcast %39 : f32 to vector<2x128xf32>
    %52 = arith.mulf %50, %51 : vector<2x128xf32>
    %c0_2 = arith.constant 0 : index
    %c3 = arith.constant 3 : index
    %c0_3 = arith.constant 0 : index
    %c0_4 = arith.constant 0 : index
    %53 = vector.load %arg4[%c0_2, %c3, %c0_3, %c0_4] : memref<1x14x2x128xf32, #tpu.memory_space<vmem>>, vector<1x1x2x128xf32>
    %54 = vector.shape_cast %53 : vector<1x1x2x128xf32> to vector<2x128xf32>
    %cst = arith.constant 2.000000e-01 : f32
    %55 = vector.broadcast %cst : f32 to vector<2x128xf32>
    %56 = arith.mulf %54, %55 : vector<2x128xf32>
    %57 = arith.addf %52, %56 : vector<2x128xf32>
    %c1 = arith.constant 1 : index
    %c0_5 = arith.constant 0 : index
    %c0_6 = arith.constant 0 : index
    %58 = vector.load %arg3[%c1, %c0_5, %c0_6] : memref<2x2x128xf32, #tpu.memory_space<vmem>>, vector<1x2x128xf32>
    %59 = vector.shape_cast %58 : vector<1x2x128xf32> to vector<2x128xf32>
    %60 = vector.broadcast %42 : f32 to vector<2x128xf32>
    %61 = arith.mulf %59, %60 : vector<2x128xf32>
    %c0_7 = arith.constant 0 : index
    %c4 = arith.constant 4 : index
    %c0_8 = arith.constant 0 : index
    %c0_9 = arith.constant 0 : index
    %62 = vector.load %arg4[%c0_7, %c4, %c0_8, %c0_9] : memref<1x14x2x128xf32, #tpu.memory_space<vmem>>, vector<1x1x2x128xf32>
    %63 = vector.shape_cast %62 : vector<1x1x2x128xf32> to vector<2x128xf32>
    %cst_10 = arith.constant 2.000000e-01 : f32
    %64 = vector.broadcast %cst_10 : f32 to vector<2x128xf32>
    %65 = arith.mulf %63, %64 : vector<2x128xf32>
    %66 = arith.addf %61, %65 : vector<2x128xf32>
    %cst_11 = arith.constant 1.000000e+00 : f32
    %67 = vector.broadcast %cst_11 : f32 to vector<2x128xf32>
    %68 = arith.subf %57, %67 : vector<2x128xf32>
    %69 = vector.broadcast %45 : f32 to vector<2x128xf32>
    %70 = arith.mulf %68, %69 : vector<2x128xf32>
    %cst_12 = arith.constant 1.000000e+00 : f32
    %71 = vector.broadcast %cst_12 : f32 to vector<2x128xf32>
    %72 = arith.subf %71, %66 : vector<2x128xf32>
    %73 = vector.broadcast %48 : f32 to vector<2x128xf32>
    %74 = arith.mulf %72, %73 : vector<2x128xf32>
    %75 = vector.broadcast %3 : f32 to vector<2x128xf32>
    %76 = arith.mulf %70, %75 : vector<2x128xf32>
    %77 = vector.broadcast %6 : f32 to vector<2x128xf32>
    %78 = arith.mulf %74, %77 : vector<2x128xf32>
    %79 = arith.addf %76, %78 : vector<2x128xf32>
    %80 = vector.broadcast %9 : f32 to vector<2x128xf32>
    %81 = arith.subf %79, %80 : vector<2x128xf32>
    %82 = vector.broadcast %12 : f32 to vector<2x128xf32>
    %83 = arith.mulf %70, %82 : vector<2x128xf32>
    %84 = vector.broadcast %15 : f32 to vector<2x128xf32>
    %85 = arith.mulf %74, %84 : vector<2x128xf32>
    %86 = arith.addf %83, %85 : vector<2x128xf32>
    %87 = vector.broadcast %18 : f32 to vector<2x128xf32>
    %88 = arith.subf %86, %87 : vector<2x128xf32>
    %89 = vector.broadcast %21 : f32 to vector<2x128xf32>
    %90 = arith.mulf %70, %89 : vector<2x128xf32>
    %91 = vector.broadcast %24 : f32 to vector<2x128xf32>
    %92 = arith.mulf %74, %91 : vector<2x128xf32>
    %93 = arith.addf %90, %92 : vector<2x128xf32>
    %94 = vector.broadcast %27 : f32 to vector<2x128xf32>
    %95 = arith.subf %93, %94 : vector<2x128xf32>
    %96 = arith.mulf %81, %81 : vector<2x128xf32>
    %97 = arith.mulf %88, %88 : vector<2x128xf32>
    %98 = arith.addf %96, %97 : vector<2x128xf32>
    %99 = arith.mulf %95, %95 : vector<2x128xf32>
    %100 = arith.addf %98, %99 : vector<2x128xf32>
    %cst_13 = arith.constant 1.000000e-24 : f32
    %101 = vector.broadcast %cst_13 : f32 to vector<2x128xf32>
    %102 = arith.maximumf %100, %101 : vector<2x128xf32>
    %103 = math.rsqrt %102 : vector<2x128xf32>
    %c0_14 = arith.constant 0 : index
    %c5 = arith.constant 5 : index
    %c0_15 = arith.constant 0 : index
    %c0_16 = arith.constant 0 : index
    %104 = vector.load %arg4[%c0_14, %c5, %c0_15, %c0_16] : memref<1x14x2x128xf32, #tpu.memory_space<vmem>>, vector<1x1x2x128xf32>
    %105 = vector.shape_cast %104 : vector<1x1x2x128xf32> to vector<2x128xf32>
    %cst_17 = arith.constant 1.850000e+00 : f32
    %106 = vector.broadcast %cst_17 : f32 to vector<2x128xf32>
    %107 = arith.addf %105, %106 : vector<2x128xf32>
    %108 = arith.mulf %107, %103 : vector<2x128xf32>
    %109 = arith.mulf %108, %81 : vector<2x128xf32>
    %110 = vector.broadcast %30 : f32 to vector<2x128xf32>
    %111 = arith.addf %110, %109 : vector<2x128xf32>
    %112 = arith.mulf %108, %88 : vector<2x128xf32>
    %113 = vector.broadcast %33 : f32 to vector<2x128xf32>
    %114 = arith.addf %113, %112 : vector<2x128xf32>
    %115 = arith.mulf %108, %95 : vector<2x128xf32>
    %116 = vector.broadcast %36 : f32 to vector<2x128xf32>
    %117 = arith.addf %116, %115 : vector<2x128xf32>
    %118 = vector.shape_cast %111 : vector<2x128xf32> to vector<1x2x128xf32>
    %119 = vector.shape_cast %114 : vector<2x128xf32> to vector<1x2x128xf32>
    %120 = vector.shape_cast %117 : vector<2x128xf32> to vector<1x2x128xf32>
    %121 = tpu.concatenate %118, %119, %120 in 0 : vector<1x2x128xf32>, vector<1x2x128xf32>, vector<1x2x128xf32> -> vector<3x2x128xf32>
    %c0_18 = arith.constant 0 : index
    %c0_19 = arith.constant 0 : index
    %c0_20 = arith.constant 0 : index
    %c0_21 = arith.constant 0 : index
    %122 = vector.load %arg5[%c0_18, %c0_19, %c0_20, %c0_21] : memref<1x3x2x128xf32, #tpu.memory_space<vmem>>, vector<1x3x2x128xf32>
    %123 = vector.shape_cast %122 : vector<1x3x2x128xf32> to vector<3x2x128xf32>
    %124 = vector.shape_cast %121 : vector<3x2x128xf32> to vector<1x3x2x128xf32>
    tpu.vector_store %arg5[%c0_18, %c0_19, %c0_20, %c0_21], %124 {strides = array<i32>} : memref<1x3x2x128xf32, #tpu.memory_space<vmem>>, vector<1x3x2x128xf32>,
    %c0_22 = arith.constant 0 : index
    %c0_23 = arith.constant 0 : index
    %c0_24 = arith.constant 0 : index
    %c0_25 = arith.constant 0 : index
    %125 = vector.load %arg4[%c0_22, %c0_23, %c0_24, %c0_25] : memref<1x14x2x128xf32, #tpu.memory_space<vmem>>, vector<1x3x2x128xf32>
    %126 = vector.shape_cast %125 : vector<1x3x2x128xf32> to vector<3x2x128xf32>
    %cst_26 = arith.constant 0.354490757 : f32
    %127 = vector.broadcast %cst_26 : f32 to vector<3x2x128xf32>
    %128 = arith.mulf %126, %127 : vector<3x2x128xf32>
    %c0_27 = arith.constant 0 : index
    %c0_28 = arith.constant 0 : index
    %c0_29 = arith.constant 0 : index
    %c0_30 = arith.constant 0 : index
    %129 = vector.load %arg6[%c0_27, %c0_28, %c0_29, %c0_30] : memref<1x3x2x128xf32, #tpu.memory_space<vmem>>, vector<1x3x2x128xf32>
    %130 = vector.shape_cast %129 : vector<1x3x2x128xf32> to vector<3x2x128xf32>
    %131 = vector.shape_cast %128 : vector<3x2x128xf32> to vector<1x3x2x128xf32>
    tpu.vector_store %arg6[%c0_27, %c0_28, %c0_29, %c0_30], %131 {strides = array<i32>} : memref<1x3x2x128xf32, #tpu.memory_space<vmem>>, vector<1x3x2x128xf32>,
    %c0_31 = arith.constant 0 : index
    %c6 = arith.constant 6 : index
    %c0_32 = arith.constant 0 : index
    %c0_33 = arith.constant 0 : index
    %132 = vector.load %arg4[%c0_31, %c6, %c0_32, %c0_33] : memref<1x14x2x128xf32, #tpu.memory_space<vmem>>, vector<1x1x2x128xf32>
    %133 = vector.shape_cast %132 : vector<1x1x2x128xf32> to vector<1x2x128xf32>
    %cst_34 = arith.constant -4.595120e+00 : f32
    %134 = vector.broadcast %cst_34 : f32 to vector<1x2x128xf32>
    %135 = arith.addf %133, %134 : vector<1x2x128xf32>
    %136 = arith.negf %135 : vector<1x2x128xf32>
    %137 = math.exp %136 : vector<1x2x128xf32>
    %cst_35 = arith.constant 1.000000e+00 : f32
    %138 = vector.broadcast %cst_35 : f32 to vector<1x2x128xf32>
    %139 = arith.addf %138, %137 : vector<1x2x128xf32>
    %140 = arith.divf %138, %139 : vector<1x2x128xf32>
    %c0_36 = arith.constant 0 : index
    %c0_37 = arith.constant 0 : index
    %c0_38 = arith.constant 0 : index
    %c0_39 = arith.constant 0 : index
    %141 = vector.load %arg7[%c0_36, %c0_37, %c0_38, %c0_39] : memref<1x1x2x128xf32, #tpu.memory_space<vmem>>, vector<1x1x2x128xf32>
    %142 = vector.shape_cast %141 : vector<1x1x2x128xf32> to vector<1x2x128xf32>
    %143 = vector.shape_cast %140 : vector<1x2x128xf32> to vector<1x1x2x128xf32>
    tpu.vector_store %arg7[%c0_36, %c0_37, %c0_38, %c0_39], %143 {strides = array<i32>} : memref<1x1x2x128xf32, #tpu.memory_space<vmem>>, vector<1x1x2x128xf32>,
    %c0_40 = arith.constant 0 : index
    %c7 = arith.constant 7 : index
    %c0_41 = arith.constant 0 : index
    %c0_42 = arith.constant 0 : index
    %144 = vector.load %arg4[%c0_40, %c7, %c0_41, %c0_42] : memref<1x14x2x128xf32, #tpu.memory_space<vmem>>, vector<1x3x2x128xf32>
    %145 = vector.shape_cast %144 : vector<1x3x2x128xf32> to vector<3x2x128xf32>
    %cst_43 = arith.constant 1.000000e-01 : f32
    %146 = vector.broadcast %cst_43 : f32 to vector<3x2x128xf32>
    %147 = arith.mulf %145, %146 : vector<3x2x128xf32>
    %cst_44 = arith.constant -4.60517025 : f32
    %148 = vector.broadcast %cst_44 : f32 to vector<3x2x128xf32>
    %149 = arith.addf %147, %148 : vector<3x2x128xf32>
    %150 = math.exp %149 : vector<3x2x128xf32>
    %c0_45 = arith.constant 0 : index
    %c0_46 = arith.constant 0 : index
    %c0_47 = arith.constant 0 : index
    %c0_48 = arith.constant 0 : index
    %151 = vector.load %arg8[%c0_45, %c0_46, %c0_47, %c0_48] : memref<1x3x2x128xf32, #tpu.memory_space<vmem>>, vector<1x3x2x128xf32>
    %152 = vector.shape_cast %151 : vector<1x3x2x128xf32> to vector<3x2x128xf32>
    %153 = vector.shape_cast %150 : vector<3x2x128xf32> to vector<1x3x2x128xf32>
    tpu.vector_store %arg8[%c0_45, %c0_46, %c0_47, %c0_48], %153 {strides = array<i32>} : memref<1x3x2x128xf32, #tpu.memory_space<vmem>>, vector<1x3x2x128xf32>,
    %c0_49 = arith.constant 0 : index
    %c10 = arith.constant 10 : index
    %c0_50 = arith.constant 0 : index
    %c0_51 = arith.constant 0 : index
    %154 = vector.load %arg4[%c0_49, %c10, %c0_50, %c0_51] : memref<1x14x2x128xf32, #tpu.memory_space<vmem>>, vector<1x1x2x128xf32>
    %155 = vector.shape_cast %154 : vector<1x1x2x128xf32> to vector<2x128xf32>
    %cst_52 = arith.constant 1.000000e-01 : f32
    %156 = vector.broadcast %cst_52 : f32 to vector<2x128xf32>
    %157 = arith.mulf %155, %156 : vector<2x128xf32>
    %cst_53 = arith.constant 1.000000e+00 : f32
    %158 = vector.broadcast %cst_53 : f32 to vector<2x128xf32>
    %159 = arith.addf %157, %158 : vector<2x128xf32>
    %c0_54 = arith.constant 0 : index
    %c11 = arith.constant 11 : index
    %c0_55 = arith.constant 0 : index
    %c0_56 = arith.constant 0 : index
    %160 = vector.load %arg4[%c0_54, %c11, %c0_55, %c0_56] : memref<1x14x2x128xf32, #tpu.memory_space<vmem>>, vector<1x1x2x128xf32>
    %161 = vector.shape_cast %160 : vector<1x1x2x128xf32> to vector<2x128xf32>
    %cst_57 = arith.constant 1.000000e-01 : f32
    %162 = vector.broadcast %cst_57 : f32 to vector<2x128xf32>
    %163 = arith.mulf %161, %162 : vector<2x128xf32>
    %c0_58 = arith.constant 0 : index
    %c12 = arith.constant 12 : index
    %c0_59 = arith.constant 0 : index
    %c0_60 = arith.constant 0 : index
    %164 = vector.load %arg4[%c0_58, %c12, %c0_59, %c0_60] : memref<1x14x2x128xf32, #tpu.memory_space<vmem>>, vector<1x1x2x128xf32>
    %165 = vector.shape_cast %164 : vector<1x1x2x128xf32> to vector<2x128xf32>
    %cst_61 = arith.constant 1.000000e-01 : f32
    %166 = vector.broadcast %cst_61 : f32 to vector<2x128xf32>
    %167 = arith.mulf %165, %166 : vector<2x128xf32>
    %c0_62 = arith.constant 0 : index
    %c13 = arith.constant 13 : index
    %c0_63 = arith.constant 0 : index
    %c0_64 = arith.constant 0 : index
    %168 = vector.load %arg4[%c0_62, %c13, %c0_63, %c0_64] : memref<1x14x2x128xf32, #tpu.memory_space<vmem>>, vector<1x1x2x128xf32>
    %169 = vector.shape_cast %168 : vector<1x1x2x128xf32> to vector<2x128xf32>
    %cst_65 = arith.constant 1.000000e-01 : f32
    %170 = vector.broadcast %cst_65 : f32 to vector<2x128xf32>
    %171 = arith.mulf %169, %170 : vector<2x128xf32>
    %172 = arith.mulf %159, %159 : vector<2x128xf32>
    %173 = arith.mulf %163, %163 : vector<2x128xf32>
    %174 = arith.addf %172, %173 : vector<2x128xf32>
    %175 = arith.mulf %167, %167 : vector<2x128xf32>
    %176 = arith.addf %174, %175 : vector<2x128xf32>
    %177 = arith.mulf %171, %171 : vector<2x128xf32>
    %178 = arith.addf %176, %177 : vector<2x128xf32>
    %cst_66 = arith.constant 1.000000e-24 : f32
    %179 = vector.broadcast %cst_66 : f32 to vector<2x128xf32>
    %180 = arith.maximumf %178, %179 : vector<2x128xf32>
    %181 = math.rsqrt %180 : vector<2x128xf32>
    %182 = vector.shape_cast %159 : vector<2x128xf32> to vector<1x2x128xf32>
    %183 = vector.shape_cast %163 : vector<2x128xf32> to vector<1x2x128xf32>
    %184 = vector.shape_cast %167 : vector<2x128xf32> to vector<1x2x128xf32>
    %185 = vector.shape_cast %171 : vector<2x128xf32> to vector<1x2x128xf32>
    %186 = tpu.concatenate %182, %183, %184, %185 in 0 : vector<1x2x128xf32>, vector<1x2x128xf32>, vector<1x2x128xf32>, vector<1x2x128xf32> -> vector<4x2x128xf32>
    %187 = vector.shape_cast %181 : vector<2x128xf32> to vector<1x2x128xf32>
    %188 = vector.broadcast %187 : vector<1x2x128xf32> to vector<4x2x128xf32>
    %189 = arith.mulf %186, %188 : vector<4x2x128xf32>
    %c0_67 = arith.constant 0 : index
    %c0_68 = arith.constant 0 : index
    %c0_69 = arith.constant 0 : index
    %c0_70 = arith.constant 0 : index
    %190 = vector.load %arg9[%c0_67, %c0_68, %c0_69, %c0_70] : memref<1x4x2x128xf32, #tpu.memory_space<vmem>>, vector<1x4x2x128xf32>
    %191 = vector.shape_cast %190 : vector<1x4x2x128xf32> to vector<4x2x128xf32>
    %192 = vector.shape_cast %189 : vector<4x2x128xf32> to vector<1x4x2x128xf32>
    tpu.vector_store %arg9[%c0_67, %c0_68, %c0_69, %c0_70], %192 {strides = array<i32>} : memref<1x4x2x128xf32, #tpu.memory_space<vmem>>, vector<1x4x2x128xf32>,
    return
  }
  func.func @transform_0(%arg0: i32, %arg1: i32) -> i32 {
    %c0_i32 = arith.constant 0 : i32
    %c0_i32_0 = arith.constant 0 : i32
    return %c0_i32 : i32
  }
  func.func @transform_1(%arg0: i32, %arg1: i32) -> (i32, i32, i32) {
    %c0_i32 = arith.constant 0 : i32
    %c0_i32_0 = arith.constant 0 : i32
    %c0_i32_1 = arith.constant 0 : i32
    return %c0_i32, %arg0, %c0_i32_0 : i32, i32, i32
  }
  func.func @transform_2(%arg0: i32, %arg1: i32) -> (i32, i32, i32, i32) {
    %c0_i32 = arith.constant 0 : i32
    %c0_i32_0 = arith.constant 0 : i32
    %c0_i32_1 = arith.constant 0 : i32
    return %arg1, %c0_i32, %arg0, %c0_i32_0 : i32, i32, i32, i32
  }
  func.func @transform_3(%arg0: i32, %arg1: i32) -> (i32, i32, i32, i32) {
    %c0_i32 = arith.constant 0 : i32
    %c0_i32_0 = arith.constant 0 : i32
    %c0_i32_1 = arith.constant 0 : i32
    return %arg1, %c0_i32, %arg0, %c0_i32_0 : i32, i32, i32, i32
  }
  func.func @transform_4(%arg0: i32, %arg1: i32) -> (i32, i32, i32, i32) {
    %c0_i32 = arith.constant 0 : i32
    %c0_i32_0 = arith.constant 0 : i32
    %c0_i32_1 = arith.constant 0 : i32
    return %arg1, %c0_i32, %arg0, %c0_i32_0 : i32, i32, i32, i32
  }
  func.func @transform_5(%arg0: i32, %arg1: i32) -> (i32, i32, i32, i32) {
    %c0_i32 = arith.constant 0 : i32
    %c0_i32_0 = arith.constant 0 : i32
    %c0_i32_1 = arith.constant 0 : i32
    return %arg1, %c0_i32, %arg0, %c0_i32_0 : i32, i32, i32, i32
  }
  func.func @transform_6(%arg0: i32, %arg1: i32) -> (i32, i32, i32, i32) {
    %c0_i32 = arith.constant 0 : i32
    %c0_i32_0 = arith.constant 0 : i32
    %c0_i32_1 = arith.constant 0 : i32
    return %arg1, %c0_i32, %arg0, %c0_i32_0 : i32, i32, i32, i32
  }
  func.func @transform_7(%arg0: i32, %arg1: i32) -> (i32, i32, i32, i32) {
    %c0_i32 = arith.constant 0 : i32
    %c0_i32_0 = arith.constant 0 : i32
    %c0_i32_1 = arith.constant 0 : i32
    return %arg1, %c0_i32, %arg0, %c0_i32_0 : i32, i32, i32, i32
  }
}

</mosaic_0001>

<llo_original>
// kernel: tpu_custom_call.1
$region0: #{tpu_custom_call.1}
  #allocation0 [shape = 'u32[]', space=smem, size = 0x4, offset = 0x4, fixed_abs, tag = 'smem constant byte address 0x4 - core index']
  #allocation1 [shape = 'u32[144,128]{1,0:T(1,128)}', space=vmem, size = 0x12000, scoped, tag = 'internal scratch']
  %s0 = inlined_call_operand.hbm [shape: f32[64], index: 0, kind: input, shape index: {}]
  %s1 = inlined_call_operand.hbm [shape: f32[2,2,128], index: 1, kind: input, shape index: {}]
  %s2 = inlined_call_operand.hbm [shape: f32[4,14,2,128], index: 2, kind: input, shape index: {}]
  %s3 = inlined_call_operand.hbm [shape: f32[4,3,2,128], index: 3, kind: output, shape index: {0}]
  %s4 = inlined_call_operand.hbm [shape: f32[4,3,2,128], index: 4, kind: output, shape index: {1}]
  %s5 = inlined_call_operand.hbm [shape: f32[4,1,2,128], index: 5, kind: output, shape index: {2}]
  %s6 = inlined_call_operand.hbm [shape: f32[4,3,2,128], index: 6, kind: output, shape index: {3}]
  %s7 = inlined_call_operand.hbm [shape: f32[4,4,2,128], index: 7, kind: output, shape index: {4}]
  %8 = xla_tuple %s3, %s4, %s5, %s6, %s7
  %s9 = sld [smem:[#allocation0]]
  $region89: #{tpu_custom_call.1} parent=0
    _
  %s11 = ssub.s32 1, %s9
  %s12 = scalar_select 0, %s11, %s9
  $region1: #{tpu_custom_call.1} parent=0
    #allocation2 [shape = 'u8[512]{0}', space=smem, size = 0x200, scoped, tag = 'input window, operand 0, single buffered']
    #allocation3 [shape = 's32[2]{0}', space=sflag, size = 0x8, scoped, tag = 'scoped memory for tpu_custom_call.1']
    #allocation4 [shape = 's32[2]{0}', space=sflag, size = 0x8, scoped, tag = 'scoped memory for tpu_custom_call.1']
    #allocation5 [shape = 's32[2]{0}', space=sflag, size = 0x8, scoped, tag = 'scoped memory for tpu_custom_call.1']
    #allocation6 [shape = 'u8[2048]{0}', space=vmem, size = 0x800, scoped, tag = 'input window, operand 1, single buffered']
    #allocation7 [shape = 'u8[28672]{0}', space=vmem, size = 0x7000, scoped, tag = 'input window, operand 2']
    #allocation8 [shape = 's32[2]{0}', space=sflag, size = 0x8, scoped, tag = 'scoped memory for tpu_custom_call.1']
    #allocation9 [shape = 'u8[6144]{0}', space=vmem, size = 0x1800, scoped, tag = 'output window, operand 0']
    #allocation10 [shape = 'u8[6144]{0}', space=vmem, size = 0x1800, scoped, tag = 'output window, operand 1']
    #allocation11 [shape = 's32[2]{0}', space=sflag, size = 0x8, scoped, tag = 'scoped memory for tpu_custom_call.1']
    #allocation12 [shape = 'u8[2048]{0}', space=vmem, size = 0x800, scoped, tag = 'output window, operand 2']
    #allocation13 [shape = 'u8[6144]{0}', space=vmem, size = 0x1800, scoped, tag = 'output window, operand 3']
    #allocation14 [shape = 's32[2]{0}', space=sflag, size = 0x8, scoped, tag = 'scoped memory for tpu_custom_call.1']
    #allocation15 [shape = 'u8[8192]{0}', space=vmem, size = 0x2000, scoped, tag = 'output window, operand 4']
    %13 = vsyncpa [#allocation5], 0
    %14 = vsyncpa [#allocation3], 0
    %15 = vsyncpa [#allocation8], 0
    %s16 = scalar_lea.sflag [#allocation8], 1
    %17 = vsyncpa %s16, 0
    %18 = vsyncpa [#allocation4], 0
    %s19 = scalar_lea.sflag [#allocation4], 1
    %20 = vsyncpa %s19, 0
    %21 = vsyncpa [#allocation11], 0
    %s22 = scalar_lea.sflag [#allocation11], 1
    %23 = vsyncpa %s22, 0
    %24 = vsyncpa [#allocation14], 0
    %s25 = scalar_lea.sflag [#allocation14], 1
    %26 = vsyncpa %s25, 0
    loop: start=0, step=1, limit=6
    $region2: #{tpu_custom_call.1} parent=1 // loop_pre_header
      _
    $region3: #{tpu_custom_call.1} parent=1 // loop_header
      %s28 = sphi 0, %s32
      %p29 = scmp.ge.s32.totalorder %s28, 6
      %s35 = sphi 0, %s47
      %s36 = sphi 0, %s43
      %s37 = sphi 0, %s35
      %s38 = sphi 0, %s36
      %s39 = sphi 0, %s37
      %s40 = sphi 0, %s38
      %s48 = sphi 0, %s48
      %s50 = sphi 0, %s48
      %s51 = sphi 0, %s50
      %s65 = sphi 0, %s51
      %s71 = sphi 0, %s73
      %s74 = sphi 0, %s71
      %s75 = sphi 0, %s74
      %s91 = sphi 0, %s75
      %s99 = sphi 0, %s101
      %s102 = sphi 0, %s99
      %s103 = sphi 0, %s102
      %s119 = sphi 0, %s103
      %s127 = sphi 0, %s129
      %s130 = sphi 0, %s127
      %s131 = sphi 0, %s130
      %s147 = sphi 0, %s131
      %s155 = sphi 0, %s157
      %s158 = sphi 0, %s155
      %s159 = sphi 0, %s158
      %s175 = sphi 0, %s159
      %s183 = sphi 0, %s185
      %s186 = sphi 0, %s183
      %s187 = sphi 0, %s186
      %s203 = sphi 0, %s187
      %s211 = sphi 0, %s213
      %s214 = sphi 0, %s211
      %s215 = sphi 0, %s214
      %s231 = sphi 0, %s215
      %s239 = sphi 0, %s241
      %s242 = sphi 0, %s239
      %s243 = sphi 0, %s242
      %s259 = sphi 0, %s243
    $region4: #{tpu_custom_call.1} parent=1 // loop_header_branch
      %31 = sbr.rel (%p29) target = $region8
    $region5: #{tpu_custom_call.1} parent=1 // loop_body
      %s33 = ssub.s32 %s28, 1
      %s34 = ssub.s32 %s28, 2
      %s41 = sadd.s32 1, %s36
      %p42 = scmp.ge.s32.totalorder %s41, 4
      %s43 = scalar_select %p42, 0, %s41
      %s44 = sadd.s32 1, %s35
      %s45 = scalar_select %p42, %s44, %s35
      %p46 = scmp.ge.s32.totalorder %s45, 1
      %s47 = scalar_select %p46, 0, %s45
      %s49 = sadd.s32 %s48, 1
      %p52 = scmp.eq.s32.totalorder %s28, 3
      %p53 = scmp.ne.s32.totalorder %s48, %s50
      %p54 = scmp.eq.s32.totalorder %s28, 0
      %p55 = por %p53, %p54
      %p56 = scmp.ne.s32.totalorder %s48, %s50
      %p57 = scmp.eq.s32.totalorder %s33, 3
      %p58 = por %p56, %p57
      %p59 = scmp.ne.s32.totalorder %s50, %s51
      %p60 = scmp.eq.s32.totalorder %s33, 0
      %p61 = por %p59, %p60
      %p62 = scmp.ne.s32.totalorder %s50, %s51
      %p63 = scmp.eq.s32.totalorder %s34, 3
      %p64 = por %p62, %p63
      %p66 = scmp.ne.s32.totalorder %s51, %s65
      %p67 = scmp.eq.s32.totalorder %s34, 0
      %p68 = por %p66, %p67
      %s69 = ssub.s32 %s35, %s47
      %p70 = scmp.eq.s32.totalorder %s69, 0
      %s72 = sadd.s32 %s71, 1
      %s73 = scalar_select %p70, %s71, %s72
      %p76 = pneg %p70
      %p77 = scmp.eq.s32.totalorder %s28, 3
      %p78 = por %p76, %p77
      %p79 = scmp.ne.s32.totalorder %s71, %s74
      %p80 = scmp.eq.s32.totalorder %s28, 0
      %p81 = por %p79, %p80
      %p82 = scmp.ne.s32.totalorder %s71, %s74
      %p83 = scmp.eq.s32.totalorder %s33, 3
      %p84 = por %p82, %p83
      %p85 = scmp.ne.s32.totalorder %s74, %s75
      %p86 = scmp.eq.s32.totalorder %s33, 0
      %p87 = por %p85, %p86
      %p88 = scmp.ne.s32.totalorder %s74, %s75
      %p89 = scmp.eq.s32.totalorder %s34, 3
      %p90 = por %p88, %p89
      %p92 = scmp.ne.s32.totalorder %s75, %s91
      %p93 = scmp.eq.s32.totalorder %s34, 0
      %p94 = por %p92, %p93
      %s95 = ssub.s32 %s36, %s43
      %s96 = ssub.s32 %s35, %s47
      %s97 = sor.u32 %s95, %s96
      %p98 = scmp.eq.s32.totalorder %s97, 0
      %s100 = sadd.s32 %s99, 1
      %s101 = scalar_select %p98, %s99, %s100
      %p104 = pneg %p98
      %p105 = scmp.eq.s32.totalorder %s28, 3
      %p106 = por %p104, %p105
      %p107 = scmp.ne.s32.totalorder %s99, %s102
      %p108 = scmp.eq.s32.totalorder %s28, 0
      %p109 = por %p107, %p108
      %p110 = scmp.ne.s32.totalorder %s99, %s102
      %p111 = scmp.eq.s32.totalorder %s33, 3
      %p112 = por %p110, %p111
      %p113 = scmp.ne.s32.totalorder %s102, %s103
      %p114 = scmp.eq.s32.totalorder %s33, 0
      %p115 = por %p113, %p114
      %p116 = scmp.ne.s32.totalorder %s102, %s103
      %p117 = scmp.eq.s32.totalorder %s34, 3
      %p118 = por %p116, %p117
      %p120 = scmp.ne.s32.totalorder %s103, %s119
      %p121 = scmp.eq.s32.totalorder %s34, 0
      %p122 = por %p120, %p121
      %s123 = ssub.s32 %s36, %s43
      %s124 = ssub.s32 %s35, %s47
      %s125 = sor.u32 %s123, %s124
      %p126 = scmp.eq.s32.totalorder %s125, 0
      %s128 = sadd.s32 %s127, 1
      %s129 = scalar_select %p126, %s127, %s128
      %p132 = pneg %p126
      %p133 = scmp.eq.s32.totalorder %s28, 3
      %p134 = por %p132, %p133
      %p135 = scmp.ne.s32.totalorder %s127, %s130
      %p136 = scmp.eq.s32.totalorder %s28, 0
      %p137 = por %p135, %p136
      %p138 = scmp.ne.s32.totalorder %s127, %s130
      %p139 = scmp.eq.s32.totalorder %s33, 3
      %p140 = por %p138, %p139
      %p141 = scmp.ne.s32.totalorder %s130, %s131
      %p142 = scmp.eq.s32.totalorder %s33, 0
      %p143 = por %p141, %p142
      %p144 = scmp.ne.s32.totalorder %s130, %s131
      %p145 = scmp.eq.s32.totalorder %s34, 3
      %p146 = por %p144, %p145
      %p148 = scmp.ne.s32.totalorder %s131, %s147
      %p149 = scmp.eq.s32.totalorder %s34, 0
      %p150 = por %p148, %p149
      %s151 = ssub.s32 %s36, %s43
      %s152 = ssub.s32 %s35, %s47
      %s153 = sor.u32 %s151, %s152
      %p154 = scmp.eq.s32.totalorder %s153, 0
      %s156 = sadd.s32 %s155, 1
      %s157 = scalar_select %p154, %s155, %s156
      %p160 = pneg %p154
      %p161 = scmp.eq.s32.totalorder %s28, 3
      %p162 = por %p160, %p161
      %p163 = scmp.ne.s32.totalorder %s155, %s158
      %p164 = scmp.eq.s32.totalorder %s28, 0
      %p165 = por %p163, %p164
      %p166 = scmp.ne.s32.totalorder %s155, %s158
      %p167 = scmp.eq.s32.totalorder %s33, 3
      %p168 = por %p166, %p167
      %p169 = scmp.ne.s32.totalorder %s158, %s159
      %p170 = scmp.eq.s32.totalorder %s33, 0
      %p171 = por %p169, %p170
      %p172 = scmp.ne.s32.totalorder %s158, %s159
      %p173 = scmp.eq.s32.totalorder %s34, 3
      %p174 = por %p172, %p173
      %p176 = scmp.ne.s32.totalorder %s159, %s175
      %p177 = scmp.eq.s32.totalorder %s34, 0
      %p178 = por %p176, %p177
      %s179 = ssub.s32 %s36, %s43
      %s180 = ssub.s32 %s35, %s47
      %s181 = sor.u32 %s179, %s180
      %p182 = scmp.eq.s32.totalorder %s181, 0
      %s184 = sadd.s32 %s183, 1
      %s185 = scalar_select %p182, %s183, %s184
      %p188 = pneg %p182
      %p189 = scmp.eq.s32.totalorder %s28, 3
      %p190 = por %p188, %p189
      %p191 = scmp.ne.s32.totalorder %s183, %s186
      %p192 = scmp.eq.s32.totalorder %s28, 0
      %p193 = por %p191, %p192
      %p194 = scmp.ne.s32.totalorder %s183, %s186
      %p195 = scmp.eq.s32.totalorder %s33, 3
      %p196 = por %p194, %p195
      %p197 = scmp.ne.s32.totalorder %s186, %s187
      %p198 = scmp.eq.s32.totalorder %s33, 0
      %p199 = por %p197, %p198
      %p200 = scmp.ne.s32.totalorder %s186, %s187
      %p201 = scmp.eq.s32.totalorder %s34, 3
      %p202 = por %p200, %p201
      %p204 = scmp.ne.s32.totalorder %s187, %s203
      %p205 = scmp.eq.s32.totalorder %s34, 0
      %p206 = por %p204, %p205
      %s207 = ssub.s32 %s36, %s43
      %s208 = ssub.s32 %s35, %s47
      %s209 = sor.u32 %s207, %s208
      %p210 = scmp.eq.s32.totalorder %s209, 0
      %s212 = sadd.s32 %s211, 1
      %s213 = scalar_select %p210, %s211, %s212
      %p216 = pneg %p210
      %p217 = scmp.eq.s32.totalorder %s28, 3
      %p218 = por %p216, %p217
      %p219 = scmp.ne.s32.totalorder %s211, %s214
      %p220 = scmp.eq.s32.totalorder %s28, 0
      %p221 = por %p219, %p220
      %p222 = scmp.ne.s32.totalorder %s211, %s214
      %p223 = scmp.eq.s32.totalorder %s33, 3
      %p224 = por %p222, %p223
      %p225 = scmp.ne.s32.totalorder %s214, %s215
      %p226 = scmp.eq.s32.totalorder %s33, 0
      %p227 = por %p225, %p226
      %p228 = scmp.ne.s32.totalorder %s214, %s215
      %p229 = scmp.eq.s32.totalorder %s34, 3
      %p230 = por %p228, %p229
      %p232 = scmp.ne.s32.totalorder %s215, %s231
      %p233 = scmp.eq.s32.totalorder %s34, 0
      %p234 = por %p232, %p233
      %s235 = ssub.s32 %s36, %s43
      %s236 = ssub.s32 %s35, %s47
      %s237 = sor.u32 %s235, %s236
      %p238 = scmp.eq.s32.totalorder %s237, 0
      %s240 = sadd.s32 %s239, 1
      %s241 = scalar_select %p238, %s239, %s240
      %p244 = pneg %p238
      %p245 = scmp.eq.s32.totalorder %s28, 3
      %p246 = por %p244, %p245
      %p247 = scmp.ne.s32.totalorder %s239, %s242
      %p248 = scmp.eq.s32.totalorder %s28, 0
      %p249 = por %p247, %p248
      %p250 = scmp.ne.s32.totalorder %s239, %s242
      %p251 = scmp.eq.s32.totalorder %s33, 3
      %p252 = por %p250, %p251
      %p253 = scmp.ne.s32.totalorder %s242, %s243
      %p254 = scmp.eq.s32.totalorder %s33, 0
      %p255 = por %p253, %p254
      %p256 = scmp.ne.s32.totalorder %s242, %s243
      %p257 = scmp.eq.s32.totalorder %s34, 3
      %p258 = por %p256, %p257
      %p260 = scmp.ne.s32.totalorder %s243, %s259
      %p261 = scmp.eq.s32.totalorder %s34, 0
      %p262 = por %p260, %p261
      %p263 = scmp.le.s32.totalorder 1, %s28
      %p264 = scmp.lt.s32.totalorder %s28, 5
      %p265 = pnand %p263, %p264
      %p266 = pneg %p265
      // Predicated region
      $region9: #{tpu_custom_call.1} parent=5 // pred_check
        _
      $region10: #{tpu_custom_call.1} parent=5 // pred_check_branch
        %268 = sbr.rel (%p265) target = $region12
      $region11: #{tpu_custom_call.1} parent=5 // pred_region
        %s269 = ssub.s32 %s28, 1
        // Predicated region
        $region13: #{tpu_custom_call.1} parent=11 // pred_check
          %p270 = pneg %p61
        $region14: #{tpu_custom_call.1} parent=11 // pred_check_branch
          %272 = sbr.rel (%p270) target = $region16
        $region15: #{tpu_custom_call.1} parent=11 // pred_region
          %s274 = ssub.s32 16, 16
          %275 = vsyncadd [#allocation5], %s274
          %278 = dma.hbm_to_smem %s0, 16, [#allocation2], [#allocation5]
        $region16: #{tpu_custom_call.1} parent=11 // pred_fallthru
          _
        // Predicated region
        $region17: #{tpu_custom_call.1} parent=11 // pred_check
          %p279 = pneg %p87
        $region18: #{tpu_custom_call.1} parent=11 // pred_check_branch
          %281 = sbr.rel (%p279) target = $region20
        $region19: #{tpu_custom_call.1} parent=11 // pred_region
          %s283 = ssub.s32 64, 64
          %284 = vsyncadd [#allocation3], %s283
          %s285 = smul.addr %s37, 32
          %s286 = scalar_lea.hbm %s1, %s285
          %s287 = sshll.u32 [#allocation6], 4
          %s288 = int_to_ptr.vmem [resolvable:$true] %s287
          %293 = dma.hbm_to_vmem [thread:$0]  %s286, 64, %s288, [#allocation3], 32, 32, 2
        $region20: #{tpu_custom_call.1} parent=11 // pred_fallthru
          _
      $region12: #{tpu_custom_call.1} parent=5 // pred_fallthru
        _
      %p294 = scmp.lt.s32.totalorder %s28, 4
      // Predicated region
      $region21: #{tpu_custom_call.1} parent=5 // pred_check
        %p295 = pneg %p294
      $region22: #{tpu_custom_call.1} parent=5 // pred_check_branch
        %297 = sbr.rel (%p295) target = $region24
      $region23: #{tpu_custom_call.1} parent=5 // pred_region
        // Predicated region
        $region25: #{tpu_custom_call.1} parent=23 // pred_check
          %p298 = pneg %p109
        $region26: #{tpu_custom_call.1} parent=23 // pred_check_branch
          %300 = sbr.rel (%p298) target = $region28
        $region27: #{tpu_custom_call.1} parent=23 // pred_region
          %s301 = sand.u32 %s99, 1
          %s302 = scalar_lea.sflag [#allocation8], %s301
          %s303 = sand.u32 %s99, 1
          %s304 = smul.addr %s303, 28
          %s305 = scalar_lea.vmem [#allocation7], %s304
          %s307 = ssub.s32 448, 448
          %308 = vsyncadd %s302, %s307
          %s309 = smul.addr %s36, 14
          %s310 = sadd.s32 %s35, %s309
          %s311 = smul.addr %s310, 32
          %s312 = scalar_lea.hbm %s2, %s311
          %s313 = sshll.u32 %s305, 4
          %s314 = int_to_ptr.vmem [resolvable:$true] %s313
          %319 = dma.hbm_to_vmem [thread:$0]  %s312, 448, %s314, %s302, 32, 32, 2
        $region28: #{tpu_custom_call.1} parent=23 // pred_fallthru
          _
      $region24: #{tpu_custom_call.1} parent=5 // pred_fallthru
        _
      %p320 = scmp.le.s32.totalorder 1, %s28
      %p321 = scmp.lt.s32.totalorder %s28, 5
      %p322 = pnand %p320, %p321
      %p323 = pneg %p322
      // Predicated region
      $region29: #{tpu_custom_call.1} parent=5 // pred_check
        _
      $region30: #{tpu_custom_call.1} parent=5 // pred_check_branch
        %325 = sbr.rel (%p322) target = $region32
      $region31: #{tpu_custom_call.1} parent=5 // pred_region
        %s326 = ssub.s32 %s28, 1
        // Predicated region
        $region33: #{tpu_custom_call.1} parent=31 // pred_check
          %p327 = pneg %p61
        $region34: #{tpu_custom_call.1} parent=31 // pred_check_branch
          %329 = sbr.rel (%p327) target = $region36
        $region35: #{tpu_custom_call.1} parent=31 // pred_region
          %330 = dma.done [#allocation5], 16
        $region36: #{tpu_custom_call.1} parent=31 // pred_fallthru
          _
        // Predicated region
        $region37: #{tpu_custom_call.1} parent=31 // pred_check
          %p331 = pneg %p87
        $region38: #{tpu_custom_call.1} parent=31 // pred_check_branch
          %333 = sbr.rel (%p331) target = $region40
        $region39: #{tpu_custom_call.1} parent=31 // pred_region
          %334 = dma.done [#allocation3], 64
        $region40: #{tpu_custom_call.1} parent=31 // pred_fallthru
          _
        %s335 = sand.u32 %s102, 1
        %s336 = scalar_lea.sflag [#allocation8], %s335
        %s337 = sand.u32 %s102, 1
        %s338 = smul.addr %s337, 28
        %s339 = scalar_lea.vmem [#allocation7], %s338
        // Predicated region
        $region41: #{tpu_custom_call.1} parent=31 // pred_check
          %p340 = pneg %p115
        $region42: #{tpu_custom_call.1} parent=31 // pred_check_branch
          %342 = sbr.rel (%p340) target = $region44
        $region43: #{tpu_custom_call.1} parent=31 // pred_region
          %343 = dma.done %s336, 448
        $region44: #{tpu_custom_call.1} parent=31 // pred_fallthru
          _
        %344 = sfence
        %p345 = pneg %p61
        %p346 = pneg %p58
        %p347 = pneg %p87
        %p348 = pneg %p84
        %s349 = sand.u32 %s102, 1
        %s350 = scalar_lea.sflag [#allocation8], %s349
        %s351 = sand.u32 %s102, 1
        %s352 = smul.addr %s351, 28
        %s353 = scalar_lea.vmem [#allocation7], %s352
        %p354 = pneg %p115
        %p355 = pneg %p112
        %p356 = pneg %p143
        %p357 = pneg %p140
        %s358 = sand.u32 %s130, 1
        %s359 = scalar_lea.sflag [#allocation4], %s358
        %s360 = sand.u32 %s130, 1
        %s361 = smul.addr %s360, 6
        %s362 = scalar_lea.vmem [#allocation9], %s361
        %p363 = pneg %p171
        %p364 = pneg %p168
        %s365 = sand.u32 %s33, 1
        %s366 = scalar_lea.sflag [#allocation11], %s365
        %s367 = sand.u32 %s158, 1
        %s368 = smul.addr %s367, 6
        %s369 = scalar_lea.vmem [#allocation10], %s368
        %p370 = pneg %p199
        %p371 = pneg %p196
        %s372 = sand.u32 %s33, 1
        %s373 = scalar_lea.sflag [#allocation11], %s372
        %s374 = sand.u32 %s186, 1
        %s375 = smul.addr %s374, 2
        %s376 = scalar_lea.vmem [#allocation12], %s375
        %p377 = pneg %p227
        %p378 = pneg %p224
        %s379 = sand.u32 %s33, 1
        %s380 = scalar_lea.sflag [#allocation14], %s379
        %s381 = sand.u32 %s214, 1
        %s382 = smul.addr %s381, 6
        %s383 = scalar_lea.vmem [#allocation13], %s382
        %p384 = pneg %p255
        %p385 = pneg %p252
        %s386 = sand.u32 %s33, 1
        %s387 = scalar_lea.sflag [#allocation14], %s386
        %s388 = sand.u32 %s242, 1
        %s389 = smul.addr %s388, 8
        %s390 = scalar_lea.vmem [#allocation15], %s389
        %s391 = smul.u32 %s38, 16
        %s392 = sld [smem:[#allocation2 + %s391]]
        %s393 = sadd.s32 %s391, 1
        %s394 = sld [smem:[#allocation2 + %s393]]
        %s395 = sadd.s32 %s391, 2
        %s396 = sld [smem:[#allocation2 + %s395]]
        %s397 = sadd.s32 %s391, 3
        %s398 = sld [smem:[#allocation2 + %s397]]
        %s399 = sadd.s32 %s391, 4
        %s400 = sld [smem:[#allocation2 + %s399]]
        %s401 = sadd.s32 %s391, 5
        %s402 = sld [smem:[#allocation2 + %s401]]
        %s403 = sadd.s32 %s391, 6
        %s404 = sld [smem:[#allocation2 + %s403]]
        %s405 = sadd.s32 %s391, 7
        %s406 = sld [smem:[#allocation2 + %s405]]
        %s407 = sadd.s32 %s391, 8
        %s408 = sld [smem:[#allocation2 + %s407]]
        %s409 = sadd.s32 %s391, 9
        %s410 = sld [smem:[#allocation2 + %s409]]
        %s411 = sadd.s32 %s391, 10
        %s412 = sld [smem:[#allocation2 + %s411]]
        %s413 = sadd.s32 %s391, 11
        %s414 = sld [smem:[#allocation2 + %s413]]
        %s415 = sadd.s32 %s391, 12
        %s416 = sld [smem:[#allocation2 + %s415]]
        %s417 = sadd.s32 %s391, 13
        %s418 = sld [smem:[#allocation2 + %s417]]
        %s419 = sadd.s32 %s391, 14
        %s420 = sld [smem:[#allocation2 + %s419]]
        %s421 = sadd.s32 %s391, 15
        %s422 = sld [smem:[#allocation2 + %s421]]
        %v423 = vld [vmem:[#allocation6] sm:$0x3]
        %v424 = vstv %s416
        %v425 = vmul.f32 %v423, %v424
        %s426 = scalar_lea.vmem %s339, 6 [#allocation7]
        %v427 = vld [vmem:[%s426] sm:$0x3]
        %v428 = vmul.f32 %v427, 0.2
        %v429 = vadd.f32 %v425, %v428
        %s430 = scalar_lea.vmem [#allocation6], 2
        %v431 = vld [vmem:[%s430] sm:$0x3]
        %v432 = vstv %s418
        %v433 = vmul.f32 %v431, %v432
        %s434 = scalar_lea.vmem %s339, 8 [#allocation7]
        %v435 = vld [vmem:[%s434] sm:$0x3]
        %v436 = vmul.f32 %v435, 0.2
        %v437 = vadd.f32 %v433, %v436
        %v438 = vsub.f32 %v429, 1.0
        %v439 = vstv %s420
        %v440 = vmul.f32 %v438, %v439
        %v441 = vsub.f32 1.0, %v437
        %v442 = vstv %s422
        %v443 = vmul.f32 %v441, %v442
        %v444 = vstv %s392
        %v445 = vmul.f32 %v440, %v444
        %v446 = vstv %s394
        %v447 = vmul.f32 %v443, %v446
        %v448 = vadd.f32 %v445, %v447
        %v449 = vstv %s396
        %v450 = vsub.f32 %v448, %v449
        %v451 = vstv %s398
        %v452 = vmul.f32 %v440, %v451
        %v453 = vstv %s400
        %v454 = vmul.f32 %v443, %v453
        %v455 = vadd.f32 %v452, %v454
        %v456 = vstv %s402
        %v457 = vsub.f32 %v455, %v456
        %v458 = vstv %s404
        %v459 = vmul.f32 %v440, %v458
        %v460 = vstv %s406
        %v461 = vmul.f32 %v443, %v460
        %v462 = vadd.f32 %v459, %v461
        %v463 = vstv %s408
        %v464 = vsub.f32 %v462, %v463
        %v465 = vmul.f32 %v450, %v450
        %v466 = vmul.f32 %v457, %v457
        %v467 = vadd.f32 %v465, %v466
        %v468 = vmul.f32 %v464, %v464
        %v469 = vadd.f32 %v467, %v468
        %v470 = vmax.f32 %v469, 1e-24
        %v471 = vrsqrt.pop %v470
        %s472 = scalar_lea.vmem %s339, 10 [#allocation7]
        %v473 = vld [vmem:[%s472] sm:$0x3]
        %v474 = vadd.f32 %v473, 1.85
        %v475 = vmul.f32 %v474, %v471
        %v476 = vmul.f32 %v475, %v450
        %v477 = vstv %s410
        %v478 = vadd.f32 %v477, %v476
        %v479 = vmul.f32 %v475, %v457
        %v480 = vstv %s412
        %v481 = vadd.f32 %v480, %v479
        %v482 = vmul.f32 %v475, %v464
        %v483 = vstv %s414
        %v484 = vadd.f32 %v483, %v482
        %485 = vst [vmem:[%s362] sm:$0x3] %v478
        %486 = vst [vmem:[%s362 + $0x2] sm:$0x3] %v481
        %487 = vst [vmem:[%s362 + $0x4] sm:$0x3] %v484
        %v488 = vld [vmem:[%s339] sm:$0x3]
        %v489 = vld [vmem:[%s339 + $0x2] sm:$0x3]
        %v490 = vld [vmem:[%s339 + $0x4] sm:$0x3]
        %v491 = vmul.f32 %v488, 0.35449076
        %v492 = vmul.f32 %v489, 0.35449076
        %v493 = vmul.f32 %v490, 0.35449076
        %494 = vst [vmem:[%s369] sm:$0x3] %v491
        %495 = vst [vmem:[%s369 + $0x2] sm:$0x3] %v492
        %496 = vst [vmem:[%s369 + $0x4] sm:$0x3] %v493
        %s497 = scalar_lea.vmem %s339, 12 [#allocation7]
        %v498 = vld [vmem:[%s497] sm:$0x3]
        %v499 = vadd.f32 %v498, -4.59512
        %v500 = vxor.u32 %v499, 2147483648
        %v501 = vmul.f32 %v500, 1.442695
        %v502 = vpow.pop %v501
        %v503 = vadd.f32 %v502, 1.0
        %v504 = vrcp.pop %v503
        %v505 = vmul.f32 1.0, %v504
        %506 = vst [vmem:[%s376] sm:$0x3] %v505
        %s507 = scalar_lea.vmem %s339, 14 [#allocation7]
        %v508 = vld [vmem:[%s507] sm:$0x3]
        %v509 = vld [vmem:[%s507 + $0x2] sm:$0x3]
        %v510 = vld [vmem:[%s507 + $0x4] sm:$0x3]
        %v511 = vmul.f32 %v508, 0.1
        %v512 = vmul.f32 %v509, 0.1
        %v513 = vmul.f32 %v510, 0.1
        %v514 = vadd.f32 %v511, -4.6051702
        %v515 = vadd.f32 %v512, -4.6051702
        %v516 = vadd.f32 %v513, -4.6051702
        %v517 = vmul.f32 %v514, 1.442695
        %v518 = vpow.pop %v517
        %v519 = vmul.f32 %v515, 1.442695
        %v520 = vpow.pop %v519
        %v521 = vmul.f32 %v516, 1.442695
        %v522 = vpow.pop %v521
        %523 = vst [vmem:[%s383] sm:$0x3] %v518
        %524 = vst [vmem:[%s383 + $0x2] sm:$0x3] %v520
        %525 = vst [vmem:[%s383 + $0x4] sm:$0x3] %v522
        %s526 = scalar_lea.vmem %s339, 20 [#allocation7]
        %v527 = vld [vmem:[%s526] sm:$0x3]
        %v528 = vmul.f32 %v527, 0.1
        %v529 = vadd.f32 %v528, 1.0
        %s530 = scalar_lea.vmem %s339, 22 [#allocation7]
        %v531 = vld [vmem:[%s530] sm:$0x3]
        %v532 = vmul.f32 %v531, 0.1
        %s533 = scalar_lea.vmem %s339, 24 [#allocation7]
        %v534 = vld [vmem:[%s533] sm:$0x3]
        %v535 = vmul.f32 %v534, 0.1
        %s536 = scalar_lea.vmem %s339, 26 [#allocation7]
        %v537 = vld [vmem:[%s536] sm:$0x3]
        %v538 = vmul.f32 %v537, 0.1
        %v539 = vmul.f32 %v529, %v529
        %v540 = vmul.f32 %v532, %v532
        %v541 = vadd.f32 %v539, %v540
        %v542 = vmul.f32 %v535, %v535
        %v543 = vadd.f32 %v541, %v542
        %v544 = vmul.f32 %v538, %v538
        %v545 = vadd.f32 %v543, %v544
        %v546 = vmax.f32 %v545, 1e-24
        %v547 = vrsqrt.pop %v546
        %v548 = vmul.f32 %v529, %v547
        %v549 = vmul.f32 %v532, %v547
        %v550 = vmul.f32 %v535, %v547
        %v551 = vmul.f32 %v538, %v547
        %552 = vst [vmem:[%s390] sm:$0x3] %v548
        %553 = vst [vmem:[%s390 + $0x2] sm:$0x3] %v549
        %554 = vst [vmem:[%s390 + $0x4] sm:$0x3] %v550
        %555 = vst [vmem:[%s390 + $0x6] sm:$0x3] %v551
        %s556 = sand.u32 %s130, 1
        %s557 = scalar_lea.sflag [#allocation4], %s556
        %s558 = sand.u32 %s130, 1
        %s559 = smul.addr %s558, 6
        %s560 = scalar_lea.vmem [#allocation9], %s559
        %s561 = sand.u32 %s33, 1
        %s562 = scalar_lea.sflag [#allocation11], %s561
        %s563 = sand.u32 %s158, 1
        %s564 = smul.addr %s563, 6
        %s565 = scalar_lea.vmem [#allocation10], %s564
        %s566 = sand.u32 %s33, 1
        %s567 = scalar_lea.sflag [#allocation11], %s566
        %s568 = sand.u32 %s186, 1
        %s569 = smul.addr %s568, 2
        %s570 = scalar_lea.vmem [#allocation12], %s569
        %s571 = sand.u32 %s33, 1
        %s572 = scalar_lea.sflag [#allocation14], %s571
        %s573 = sand.u32 %s214, 1
        %s574 = smul.addr %s573, 6
        %s575 = scalar_lea.vmem [#allocation13], %s574
        %s576 = sand.u32 %s33, 1
        %s577 = scalar_lea.sflag [#allocation14], %s576
        %s578 = sand.u32 %s242, 1
        %s579 = smul.addr %s578, 8
        %s580 = scalar_lea.vmem [#allocation15], %s579
        // Predicated region
        $region45: #{tpu_custom_call.1} parent=31 // pred_check
          %p581 = pneg %p140
        $region46: #{tpu_custom_call.1} parent=31 // pred_check_branch
          %583 = sbr.rel (%p581) target = $region48
        $region47: #{tpu_custom_call.1} parent=31 // pred_region
          %s585 = ssub.s32 96, 96
          %586 = vsyncadd %s557, %s585
          %s587 = smul.addr %s38, 3
          %s588 = sadd.s32 %s37, %s587
          %s589 = smul.addr %s588, 32
          %s590 = scalar_lea.hbm %s3, %s589
          %s591 = sshll.u32 %s560, 4
          %s592 = int_to_ptr.vmem [resolvable:$true] %s591
          %597 = dma.vmem_to_hbm [thread:$0]  %s592, 96, %s590, %s557, 32, 32, 2
        $region48: #{tpu_custom_call.1} parent=31 // pred_fallthru
          _
        // Predicated region
        $region49: #{tpu_custom_call.1} parent=31 // pred_check
          %p598 = pneg %p168
        $region50: #{tpu_custom_call.1} parent=31 // pred_check_branch
          %600 = sbr.rel (%p598) target = $region52
        $region51: #{tpu_custom_call.1} parent=31 // pred_region
          %s602 = ssub.s32 96, 96
          %603 = vsyncadd %s562, %s602
          %s604 = smul.addr %s38, 3
          %s605 = sadd.s32 %s37, %s604
          %s606 = smul.addr %s605, 32
          %s607 = scalar_lea.hbm %s4, %s606
          %s608 = sshll.u32 %s565, 4
          %s609 = int_to_ptr.vmem [resolvable:$true] %s608
          %614 = dma.vmem_to_hbm [thread:$0]  %s609, 96, %s607, %s562, 32, 32, 2
        $region52: #{tpu_custom_call.1} parent=31 // pred_fallthru
          _
        // Predicated region
        $region53: #{tpu_custom_call.1} parent=31 // pred_check
          %p615 = pneg %p196
        $region54: #{tpu_custom_call.1} parent=31 // pred_check_branch
          %617 = sbr.rel (%p615) target = $region56
        $region55: #{tpu_custom_call.1} parent=31 // pred_region
          %s619 = ssub.s32 32, 32
          %620 = vsyncadd %s567, %s619
          %s621 = sadd.s32 %s37, %s38
          %s622 = smul.addr %s621, 32
          %s623 = scalar_lea.hbm %s5, %s622
          %s625 = sshll.u32 %s570, 4
          %s626 = int_to_ptr.vmem [resolvable:$true] %s625
          %628 = dma.vmem_to_hbm [thread:$0]  %s626, 32, %s623, %s567
        $region56: #{tpu_custom_call.1} parent=31 // pred_fallthru
          _
        // Predicated region
        $region57: #{tpu_custom_call.1} parent=31 // pred_check
          %p629 = pneg %p224
        $region58: #{tpu_custom_call.1} parent=31 // pred_check_branch
          %631 = sbr.rel (%p629) target = $region60
        $region59: #{tpu_custom_call.1} parent=31 // pred_region
          %s633 = ssub.s32 96, 96
          %634 = vsyncadd %s572, %s633
          %s635 = smul.addr %s38, 3
          %s636 = sadd.s32 %s37, %s635
          %s637 = smul.addr %s636, 32
          %s638 = scalar_lea.hbm %s6, %s637
          %s639 = sshll.u32 %s575, 4
          %s640 = int_to_ptr.vmem [resolvable:$true] %s639
          %645 = dma.vmem_to_hbm [thread:$0]  %s640, 96, %s638, %s572, 32, 32, 2
        $region60: #{tpu_custom_call.1} parent=31 // pred_fallthru
          _
        // Predicated region
        $region61: #{tpu_custom_call.1} parent=31 // pred_check
          %p646 = pneg %p252
        $region62: #{tpu_custom_call.1} parent=31 // pred_check_branch
          %648 = sbr.rel (%p646) target = $region64
        $region63: #{tpu_custom_call.1} parent=31 // pred_region
          %s650 = ssub.s32 128, 128
          %651 = vsyncadd %s577, %s650
          %s652 = smul.addr %s38, 4
          %s653 = sadd.s32 %s37, %s652
          %s654 = smul.addr %s653, 32
          %s655 = scalar_lea.hbm %s7, %s654
          %s656 = sshll.u32 %s580, 4
          %s657 = int_to_ptr.vmem [resolvable:$true] %s656
          %662 = dma.vmem_to_hbm [thread:$0]  %s657, 128, %s655, %s577, 32, 32, 2
        $region64: #{tpu_custom_call.1} parent=31 // pred_fallthru
          _
      $region32: #{tpu_custom_call.1} parent=5 // pred_fallthru
        _
      %p663 = scmp.le.s32.totalorder 2, %s28
      // Predicated region
      $region65: #{tpu_custom_call.1} parent=5 // pred_check
        %p664 = pneg %p663
      $region66: #{tpu_custom_call.1} parent=5 // pred_check_branch
        %666 = sbr.rel (%p664) target = $region68
      $region67: #{tpu_custom_call.1} parent=5 // pred_region
        %s667 = ssub.s32 %s28, 2
        // Predicated region
        $region69: #{tpu_custom_call.1} parent=67 // pred_check
          %p668 = pneg %p146
        $region70: #{tpu_custom_call.1} parent=67 // pred_check_branch
          %670 = sbr.rel (%p668) target = $region72
        $region71: #{tpu_custom_call.1} parent=67 // pred_region
          %s671 = sand.u32 %s131, 1
          %s672 = scalar_lea.sflag [#allocation4], %s671
          %s673 = sand.u32 %s131, 1
          %s674 = smul.addr %s673, 6
          %s675 = scalar_lea.vmem [#allocation9], %s674
          %676 = dma.done %s672, 96
        $region72: #{tpu_custom_call.1} parent=67 // pred_fallthru
          _
        // Predicated region
        $region73: #{tpu_custom_call.1} parent=67 // pred_check
          %p677 = pneg %p174
        $region74: #{tpu_custom_call.1} parent=67 // pred_check_branch
          %679 = sbr.rel (%p677) target = $region76
        $region75: #{tpu_custom_call.1} parent=67 // pred_region
          %s680 = sand.u32 %s34, 1
          %s681 = scalar_lea.sflag [#allocation11], %s680
          %s682 = sand.u32 %s159, 1
          %s683 = smul.addr %s682, 6
          %s684 = scalar_lea.vmem [#allocation10], %s683
          %685 = dma.done %s681, 96
        $region76: #{tpu_custom_call.1} parent=67 // pred_fallthru
          _
        // Predicated region
        $region77: #{tpu_custom_call.1} parent=67 // pred_check
          %p686 = pneg %p202
        $region78: #{tpu_custom_call.1} parent=67 // pred_check_branch
          %688 = sbr.rel (%p686) target = $region80
        $region79: #{tpu_custom_call.1} parent=67 // pred_region
          %s689 = sand.u32 %s34, 1
          %s690 = scalar_lea.sflag [#allocation11], %s689
          %s691 = sand.u32 %s187, 1
          %s692 = smul.addr %s691, 2
          %s693 = scalar_lea.vmem [#allocation12], %s692
          %694 = dma.done %s690, 32
        $region80: #{tpu_custom_call.1} parent=67 // pred_fallthru
          _
        // Predicated region
        $region81: #{tpu_custom_call.1} parent=67 // pred_check
          %p695 = pneg %p230
        $region82: #{tpu_custom_call.1} parent=67 // pred_check_branch
          %697 = sbr.rel (%p695) target = $region84
        $region83: #{tpu_custom_call.1} parent=67 // pred_region
          %s698 = sand.u32 %s34, 1
          %s699 = scalar_lea.sflag [#allocation14], %s698
          %s700 = sand.u32 %s215, 1
          %s701 = smul.addr %s700, 6
          %s702 = scalar_lea.vmem [#allocation13], %s701
          %703 = dma.done %s699, 96
        $region84: #{tpu_custom_call.1} parent=67 // pred_fallthru
          _
        // Predicated region
        $region85: #{tpu_custom_call.1} parent=67 // pred_check
          %p704 = pneg %p258
        $region86: #{tpu_custom_call.1} parent=67 // pred_check_branch
          %706 = sbr.rel (%p704) target = $region88
        $region87: #{tpu_custom_call.1} parent=67 // pred_region
          %s707 = sand.u32 %s34, 1
          %s708 = scalar_lea.sflag [#allocation14], %s707
          %s709 = sand.u32 %s243, 1
          %s710 = smul.addr %s709, 8
          %s711 = scalar_lea.vmem [#allocation15], %s710
          %712 = dma.done %s708, 128
        $region88: #{tpu_custom_call.1} parent=67 // pred_fallthru
          _
      $region68: #{tpu_custom_call.1} parent=5 // pred_fallthru
        _
    $region6: #{tpu_custom_call.1} parent=1 // loop_footer
      %s32 = sadd.s32 1, %s28
    $region7: #{tpu_custom_call.1} parent=1 // loop_footer_branch
      %27 = sbr.rel target = $region3
    $region8: #{tpu_custom_call.1} parent=1 // loop_exit
      _
    %713 = vsyncpa [#allocation3], 1
    %s714 = scalar_lea.sflag [#allocation3], 1
    %715 = vsyncpa %s714, 1
    %716 = vsyncpa [#allocation8], 1
    %s717 = scalar_lea.sflag [#allocation8], 1
    %718 = vsyncpa %s717, 1
    %719 = vsyncpa [#allocation4], 1
    %s720 = scalar_lea.sflag [#allocation4], 1
    %721 = vsyncpa %s720, 1
    %722 = vsyncpa [#allocation11], 1
    %s723 = scalar_lea.sflag [#allocation11], 1
    %724 = vsyncpa %s723, 1
    %725 = vsyncpa [#allocation14], 1
    %s726 = scalar_lea.sflag [#allocation14], 1
    %727 = vsyncpa %s726, 1
    %728 = vsyncpa [#allocation5], 1
    %s729 = scalar_lea.sflag [#allocation5], 1
    %730 = vsyncpa %s729, 1

</llo_original>
